<compile_context>
chip_gen: v5e
topology: v5e:2x2
jax: 0.10.0
libtpu: 0.0.40
codegen_flags: <defaults>
</compile_context>

<pallas_src>
import jax
import jax.numpy as jnp
from jax.experimental import pallas as pl
from jax.experimental.pallas import tpu as pltpu


_LANE_CANDIDATES = (2048, 1024, 512, 256, 128)
_TINY_BYTES = 32 * 1024  # below this, a fused XLA elementwise beats kernel launch


def _sublane_multiple(dtype) -> int:
    # f32 -> 8, bf16/f16 -> 16, int8/fp8 -> 32 (sub-32-bit dtypes pack sublanes).
    return max(8, 32 // jnp.dtype(dtype).itemsize)


def _target_block_bytes() -> int:
    # v6e/v7x comfortably take 4 MiB blocks (in+out double-buffered = 16 MiB,
    # inside their 32 MiB scoped-VMEM default).  v5e's scoped default is 16 MiB,
    # so keep 2 MiB there and for any unrecognized generation.
    try:
        kind = jax.devices()[0].device_kind.lower()
    except Exception:
        kind = ""
    if "v6" in kind or "v7" in kind:
        return 4 * 1024 * 1024
    return 2 * 1024 * 1024


def _choose_layout(n_elems: int, itemsize: int, sublane: int):
    """Pick (lane_width, pad, rows, block_rows, grid_r) for a lane-dense slab."""
    # Prefer a lane width that divides n exactly (no pad/slice HBM passes) and
    # still leaves enough rows for >= 4 aligned row-blocks.
    lane_width = None
    for c in _LANE_CANDIDATES:
        if n_elems % c == 0 and (n_elems // c) >= 4 * sublane:
            lane_width = c
            break
    if lane_width is None:
        for c in _LANE_CANDIDATES:
            if n_elems % c == 0:
                lane_width = c
                break
    pad = 0
    if lane_width is None:
        # Nothing divides: minimal pad (< 128 elements) to a 128-lane slab.
        lane_width = 128
        pad = (-n_elems) % lane_width

    rows = (n_elems + pad) // lane_width

    # Cap block bytes per generation, and aim for >= 4 row-blocks so the
    # pipeline overlaps DMA with compute and both v7x TCs get work.
    max_rows_by_bytes = max(sublane, _target_block_bytes() // (lane_width * itemsize))
    block_rows = min(max_rows_by_bytes, pl.cdiv(rows, 4))
    block_rows = max(sublane, (block_rows // sublane) * sublane)
    if block_rows >= rows:
        block_rows = rows  # tiny slab: single full-extent block
    grid_r = pl.cdiv(rows, block_rows)
    return lane_width, pad, rows, block_rows, grid_r


def _apply_elementwise_pallas(fn, x):
    """Apply an elementwise fn to an array of any shape via a Pallas kernel."""
    orig_shape = x.shape
    n = x.size
    itemsize = jnp.dtype(x.dtype).itemsize

    # Tiny inputs: kernel launch + layout plumbing dominates; let XLA fuse it.
    if n == 0 or n * itemsize < _TINY_BYTES:
        return fn(x)

    sublane = _sublane_multiple(x.dtype)
    lane_width, pad, rows, block_rows, grid_r = _choose_layout(n, itemsize, sublane)

    flat = x.reshape(-1)
    if pad:
        # TODO(synk): the misaligned fallback pays one extra HBM pass for the
        # pad/slice; all 128-divisible sizes take the zero-copy path above.
        flat = jnp.pad(flat, (0, pad))
    x2d = flat.reshape(rows, lane_width)

    def kernel(x_ref, o_ref):
        # Compute in the input dtype (bf16 stays bf16 on v6e/v7x; Mosaic
        # handles any needed internal widening on v5e).
        o_ref[...] = fn(x_ref[...]).astype(o_ref.dtype)

    y2d = pl.pallas_call(
        kernel,
        out_shape=jax.ShapeDtypeStruct((rows, lane_width), x.dtype),
        grid=(grid_r,),
        in_specs=[pl.BlockSpec((block_rows, lane_width), lambda i: (i, 0))],
        out_specs=pl.BlockSpec((block_rows, lane_width), lambda i: (i, 0)),
        compiler_params=pltpu.CompilerParams(
            dimension_semantics=("parallel",)
        ),
    )(x2d)

    y = y2d.reshape(-1)
    if pad:
        y = y[:n]
    return y.reshape(orig_shape)


# --------------------------------------------------------------------------
# Lambda wrapper (mirrors the nn.Module: holds a fn + optional name).
# --------------------------------------------------------------------------
class LambdaPallas:
    def __init__(self, fn, name=None, elementwise=True):
        self.name = name
        self.fn = fn
        # Caller declares whether fn is elementwise (safe to apply per block).
        self.elementwise = elementwise

    def extra_repr(self):
        return "" if self.name is None else self.name

    def __call__(self, *args, **kwargs):
        # Pallas fast path: a single array arg and an elementwise,
        # shape/dtype-preserving fn.  Anything else: plain fn(*args, **kwargs).
        if self.elementwise and len(args) == 1 and not kwargs:
            x = args[0]
            if isinstance(x, jax.Array):
                try:
                    out = jax.eval_shape(self.fn, x)
                except Exception:
                    out = None
                if (out is not None and hasattr(out, "shape") and hasattr(out, "dtype")
                        and out.shape == x.shape and out.dtype == x.dtype):
                    return _apply_elementwise_pallas(self.fn, x)
        # TODO(synk): non-elementwise fns have no single Pallas equivalent.
        return self.fn(*args, **kwargs)


if __name__ == "__main__":
    # The wrapped callable: SiLU, written with explicit exp for clean Mosaic
    # lowering in both f32 and bf16.
    def silu(t):
        return t * (1.0 / (1.0 + jnp.exp(-t)))

    lam = LambdaPallas(silu, name="silu")

    key = jax.random.PRNGKey(0)
    k0, k1, k2, k3 = jax.random.split(key, 4)

    # 1) Small NCHW input (the PyTorch-style example shape, 8 KiB): tiny-input
    #    fast path (plain fused XLA).
    x_small = jax.random.normal(k0, (2, 4, 16, 16), dtype=jnp.float32)
    y_small = jax.block_until_ready(lam(x_small))
    assert y_small.shape == x_small.shape and y_small.dtype == x_small.dtype
    assert jnp.max(jnp.abs(y_small - silu(x_small))) < 1e-5

    # 2) Aligned f32 input (256 KiB): zero-copy slab, 4-block pipelined grid.
    x_f32 = jax.random.normal(k1, (4, 16, 32, 32), dtype=jnp.float32)
    y_f32 = jax.block_until_ready(lam(x_f32))
    assert y_f32.shape == x_f32.shape and y_f32.dtype == x_f32.dtype
    assert jnp.max(jnp.abs(y_f32 - silu(x_f32))) < 1e-5

    # 3) Ragged-row f32 input (288 KiB): rows not a multiple of block_rows,
    #    exercises Pallas edge-block masking (still zero-copy, no pad).
    x_rag = jax.random.normal(k2, (2, 36, 32, 32), dtype=jnp.float32)
    y_rag = jax.block_until_ready(lam(x_rag))
    assert y_rag.shape == x_rag.shape and y_rag.dtype == x_rag.dtype
    assert jnp.max(jnp.abs(y_rag - silu(x_rag))) < 1e-5

    # 4) Misaligned element count (~60 KiB): minimal-pad fallback path.
    x_odd = jax.random.normal(k3, (17, 31, 29), dtype=jnp.float32)
    y_odd = jax.block_until_ready(lam(x_odd))
    assert y_odd.shape == x_odd.shape and y_odd.dtype == x_odd.dtype
    assert jnp.max(jnp.abs(y_odd - silu(x_odd))) < 1e-5

    # 5) bf16 input (128 KiB): native bf16 compute, 16-row sublane alignment.
    x_bf16 = jax.random.normal(k1, (4, 16, 32, 32), dtype=jnp.bfloat16)
    y_bf16 = jax.block_until_ready(lam(x_bf16))
    assert y_bf16.shape == x_bf16.shape and y_bf16.dtype == jnp.bfloat16
    ref_bf16 = silu(x_bf16.astype(jnp.float32)).astype(jnp.bfloat16)
    err = jnp.max(jnp.abs(y_bf16.astype(jnp.float32) - ref_bf16.astype(jnp.float32)))
    assert err < 0.125

    print("KERNEL_OK")
</pallas_src>

<mosaic_0001>
module attributes {stable_mosaic.version = 11 : i64} {
  func.func @kernel(%arg0: i32, %arg1: memref<8x2048xf32, #tpu.memory_space<vmem>>, %arg2: memref<8x2048xf32, #tpu.memory_space<vmem>>) attributes {dimension_semantics = [#tpu.dimension_semantics<parallel>], iteration_bounds = array<i64: 4>, scalar_prefetch = 0 : i64, scratch_operands = 0 : i64, tpu.core_type = #tpu.core_type<tc>, window_params = [{transform_indices = @transform_0, window_bounds = array<i64: 8, 2048>}, {transform_indices = @transform_1, window_bounds = array<i64: 8, 2048>}]} {
    %c0 = arith.constant 0 : index
    %c0_0 = arith.constant 0 : index
    %0 = vector.load %arg1[%c0, %c0_0] : memref<8x2048xf32, #tpu.memory_space<vmem>>, vector<8x2048xf32>
    %cst = arith.constant 0.000000e+00 : f32
    %1 = vector.broadcast %cst : f32 to vector<8x2048xf32>
    %2 = arith.subf %1, %0 : vector<8x2048xf32>
    %3 = math.exp %2 : vector<8x2048xf32>
    %cst_1 = arith.constant 1.000000e+00 : f32
    %4 = vector.broadcast %cst_1 : f32 to vector<8x2048xf32>
    %5 = arith.addf %4, %3 : vector<8x2048xf32>
    %cst_2 = arith.constant 1.000000e+00 : f32
    %6 = vector.broadcast %cst_2 : f32 to vector<8x2048xf32>
    %7 = arith.divf %6, %5 : vector<8x2048xf32>
    %8 = arith.mulf %0, %7 : vector<8x2048xf32>
    %c0_3 = arith.constant 0 : index
    %c0_4 = arith.constant 0 : index
    %9 = vector.load %arg2[%c0_3, %c0_4] : memref<8x2048xf32, #tpu.memory_space<vmem>>, vector<8x2048xf32>
    tpu.vector_store %arg2[%c0_3, %c0_4], %8 {strides = array<i32>} : memref<8x2048xf32, #tpu.memory_space<vmem>>, vector<8x2048xf32>,
    return
  }
  func.func @transform_0(%arg0: i32) -> (i32, i32) {
    %c0_i32 = arith.constant 0 : i32
    %c0_i32_0 = arith.constant 0 : i32
    return %arg0, %c0_i32 : i32, i32
  }
  func.func @transform_1(%arg0: i32) -> (i32, i32) {
    %c0_i32 = arith.constant 0 : i32
    %c0_i32_0 = arith.constant 0 : i32
    return %arg0, %c0_i32 : i32, i32
  }
}

</mosaic_0001>

<llo_original>
// kernel: tpu_custom_call.1
$region0: #{tpu_custom_call.1}
  #allocation0 [shape = 'u32[]', space=smem, size = 0x4, offset = 0x4, fixed_abs, tag = 'smem constant byte address 0x4 - core index']
  #allocation1 [shape = 'u32[72,128]{1,0:T(1,128)}', space=vmem, size = 0x9000, scoped, tag = 'internal scratch']
  %s0 = inlined_call_operand.hbm [shape: f32[32,2048], index: 0, kind: input, shape index: {}]
  %s1 = inlined_call_operand.hbm [shape: f32[32,2048], index: 1, kind: output, shape index: {}]
  %s2 = sld [smem:[#allocation0]]
  $region41: #{tpu_custom_call.1} parent=0
    _
  %s4 = ssub.s32 1, %s2
  %s5 = scalar_select 0, %s4, %s2
  $region1: #{tpu_custom_call.1} parent=0
    #allocation2 [shape = 'u8[131072]{0}', space=vmem, size = 0x20000, scoped, tag = 'input window, operand 0']
    #allocation3 [shape = 's32[2]{0}', space=sflag, size = 0x8, scoped, tag = 'scoped memory for tpu_custom_call.1']
    #allocation4 [shape = 's32[2]{0}', space=sflag, size = 0x8, scoped, tag = 'scoped memory for tpu_custom_call.1']
    #allocation5 [shape = 'u8[131072]{0}', space=vmem, size = 0x20000, scoped, tag = 'output window, operand 0']
    %6 = vsyncpa [#allocation3], 0
    %s7 = scalar_lea.sflag [#allocation3], 1
    %8 = vsyncpa %s7, 0
    %9 = vsyncpa [#allocation4], 0
    %s10 = scalar_lea.sflag [#allocation4], 1
    %11 = vsyncpa %s10, 0
    loop: start=0, step=1, limit=6
    $region2: #{tpu_custom_call.1} parent=1 // loop_pre_header
      _
    $region3: #{tpu_custom_call.1} parent=1 // loop_header
      %s13 = sphi 0, %s17
      %p14 = scmp.ge.s32.totalorder %s13, 6
      %s23 = sphi 0, %s25
      %s26 = sphi 0, %s23
      %s27 = sphi 0, %s26
      %s43 = sphi 0, %s27
      %s49 = sphi 0, %s51
      %s52 = sphi 0, %s49
      %s53 = sphi 0, %s52
      %s69 = sphi 0, %s53
    $region4: #{tpu_custom_call.1} parent=1 // loop_header_branch
      %16 = sbr.rel (%p14) target = $region8
    $region5: #{tpu_custom_call.1} parent=1 // loop_body
      %s18 = ssub.s32 %s13, 1
      %s19 = ssub.s32 %s13, 2
      %s20 = sadd.s32 %s13, 1
      %s21 = ssub.s32 %s13, %s20
      %p22 = scmp.eq.s32.totalorder %s21, 0
      %s24 = sadd.s32 %s23, 1
      %s25 = scalar_select %p22, %s23, %s24
      %p28 = pneg %p22
      %p29 = scmp.eq.s32.totalorder %s13, 3
      %p30 = por %p28, %p29
      %p31 = scmp.ne.s32.totalorder %s23, %s26
      %p32 = scmp.eq.s32.totalorder %s13, 0
      %p33 = por %p31, %p32
      %p34 = scmp.ne.s32.totalorder %s23, %s26
      %p35 = scmp.eq.s32.totalorder %s18, 3
      %p36 = por %p34, %p35
      %p37 = scmp.ne.s32.totalorder %s26, %s27
      %p38 = scmp.eq.s32.totalorder %s18, 0
      %p39 = por %p37, %p38
      %p40 = scmp.ne.s32.totalorder %s26, %s27
      %p41 = scmp.eq.s32.totalorder %s19, 3
      %p42 = por %p40, %p41
      %p44 = scmp.ne.s32.totalorder %s27, %s43
      %p45 = scmp.eq.s32.totalorder %s19, 0
      %p46 = por %p44, %p45
      %s47 = ssub.s32 %s13, %s20
      %p48 = scmp.eq.s32.totalorder %s47, 0
      %s50 = sadd.s32 %s49, 1
      %s51 = scalar_select %p48, %s49, %s50
      %p54 = pneg %p48
      %p55 = scmp.eq.s32.totalorder %s13, 3
      %p56 = por %p54, %p55
      %p57 = scmp.ne.s32.totalorder %s49, %s52
      %p58 = scmp.eq.s32.totalorder %s13, 0
      %p59 = por %p57, %p58
      %p60 = scmp.ne.s32.totalorder %s49, %s52
      %p61 = scmp.eq.s32.totalorder %s18, 3
      %p62 = por %p60, %p61
      %p63 = scmp.ne.s32.totalorder %s52, %s53
      %p64 = scmp.eq.s32.totalorder %s18, 0
      %p65 = por %p63, %p64
      %p66 = scmp.ne.s32.totalorder %s52, %s53
      %p67 = scmp.eq.s32.totalorder %s19, 3
      %p68 = por %p66, %p67
      %p70 = scmp.ne.s32.totalorder %s53, %s69
      %p71 = scmp.eq.s32.totalorder %s19, 0
      %p72 = por %p70, %p71
      %p73 = scmp.le.s32.totalorder 1, %s13
      %p74 = scmp.lt.s32.totalorder %s13, 5
      %p75 = pnand %p73, %p74
      %p76 = pneg %p75
      // Predicated region
      $region9: #{tpu_custom_call.1} parent=5 // pred_check
        _
      $region10: #{tpu_custom_call.1} parent=5 // pred_check_branch
        %78 = sbr.rel (%p75) target = $region12
      $region11: #{tpu_custom_call.1} parent=5 // pred_region
        %s79 = ssub.s32 %s13, 1
      $region12: #{tpu_custom_call.1} parent=5 // pred_fallthru
        _
      %p80 = scmp.lt.s32.totalorder %s13, 4
      // Predicated region
      $region13: #{tpu_custom_call.1} parent=5 // pred_check
        %p81 = pneg %p80
      $region14: #{tpu_custom_call.1} parent=5 // pred_check_branch
        %83 = sbr.rel (%p81) target = $region16
      $region15: #{tpu_custom_call.1} parent=5 // pred_region
        // Predicated region
        $region17: #{tpu_custom_call.1} parent=15 // pred_check
          %p84 = pneg %p33
        $region18: #{tpu_custom_call.1} parent=15 // pred_check_branch
          %86 = sbr.rel (%p84) target = $region20
        $region19: #{tpu_custom_call.1} parent=15 // pred_region
          %s87 = sand.u32 %s23, 1
          %s88 = scalar_lea.sflag [#allocation3], %s87
          %s89 = sand.u32 %s23, 1
          %s90 = smul.addr %s89, 128
          %s91 = scalar_lea.vmem [#allocation2], %s90
          %93 = vsyncadd %s88, 0
          %s94 = smul.addr %s13, 16
          %s95 = smul.addr %s94, 8
          %s96 = scalar_lea.hbm %s0, %s95
          %s98 = sshll.u32 %s96, 4
          %s99 = int_to_ptr.hbm [resolvable:$true] %s98
          %s100 = sshll.u32 %s91, 4
          %s101 = int_to_ptr.vmem [resolvable:$true] %s100
          %103 = dma.hbm_to_vmem [thread:$0]  %s99, 2048, %s101, %s88
        $region20: #{tpu_custom_call.1} parent=15 // pred_fallthru
          _
      $region16: #{tpu_custom_call.1} parent=5 // pred_fallthru
        _
      %p104 = scmp.le.s32.totalorder 1, %s13
      %p105 = scmp.lt.s32.totalorder %s13, 5
      %p106 = pnand %p104, %p105
      %p107 = pneg %p106
      // Predicated region
      $region21: #{tpu_custom_call.1} parent=5 // pred_check
        _
      $region22: #{tpu_custom_call.1} parent=5 // pred_check_branch
        %109 = sbr.rel (%p106) target = $region24
      $region23: #{tpu_custom_call.1} parent=5 // pred_region
        %s110 = ssub.s32 %s13, 1
        %s111 = sand.u32 %s26, 1
        %s112 = scalar_lea.sflag [#allocation3], %s111
        %s113 = sand.u32 %s26, 1
        %s114 = smul.addr %s113, 128
        %s115 = scalar_lea.vmem [#allocation2], %s114
        // Predicated region
        $region25: #{tpu_custom_call.1} parent=23 // pred_check
          %p116 = pneg %p39
        $region26: #{tpu_custom_call.1} parent=23 // pred_check_branch
          %118 = sbr.rel (%p116) target = $region28
        $region27: #{tpu_custom_call.1} parent=23 // pred_region
          %120 = dma.done %s112, 2048
        $region28: #{tpu_custom_call.1} parent=23 // pred_fallthru
          _
        %s121 = sand.u32 %s26, 1
        %s122 = scalar_lea.sflag [#allocation3], %s121
        %s123 = sand.u32 %s26, 1
        %s124 = smul.addr %s123, 128
        %s125 = scalar_lea.vmem [#allocation2], %s124
        %p126 = pneg %p39
        %p127 = pneg %p36
        %p128 = pneg %p65
        %p129 = pneg %p62
        %s130 = sand.u32 %s52, 1
        %s131 = scalar_lea.sflag [#allocation4], %s130
        %s132 = sand.u32 %s52, 1
        %s133 = smul.addr %s132, 128
        %s134 = scalar_lea.vmem [#allocation5], %s133
        %v135 = vld [vmem:[%s115] sm:$0xff]
        %v136 = vld [vmem:[%s115 + $0x8] sm:$0xff]
        %v137 = vld [vmem:[%s115 + $0x10] sm:$0xff]
        %v138 = vld [vmem:[%s115 + $0x18] sm:$0xff]
        %v139 = vld [vmem:[%s115 + $0x20] sm:$0xff]
        %v140 = vld [vmem:[%s115 + $0x28] sm:$0xff]
        %v141 = vld [vmem:[%s115 + $0x30] sm:$0xff]
        %v142 = vld [vmem:[%s115 + $0x38] sm:$0xff]
        %v143 = vld [vmem:[%s115 + $0x40] sm:$0xff]
        %v144 = vld [vmem:[%s115 + $0x48] sm:$0xff]
        %v145 = vld [vmem:[%s115 + $0x50] sm:$0xff]
        %v146 = vld [vmem:[%s115 + $0x58] sm:$0xff]
        %v147 = vld [vmem:[%s115 + $0x60] sm:$0xff]
        %v148 = vld [vmem:[%s115 + $0x68] sm:$0xff]
        %v149 = vld [vmem:[%s115 + $0x70] sm:$0xff]
        %v150 = vld [vmem:[%s115 + $0x78] sm:$0xff]
        %v151 = vsub.f32 0.0, %v135
        %v152 = vsub.f32 0.0, %v136
        %v153 = vsub.f32 0.0, %v137
        %v154 = vsub.f32 0.0, %v138
        %v155 = vsub.f32 0.0, %v139
        %v156 = vsub.f32 0.0, %v140
        %v157 = vsub.f32 0.0, %v141
        %v158 = vsub.f32 0.0, %v142
        %v159 = vsub.f32 0.0, %v143
        %v160 = vsub.f32 0.0, %v144
        %v161 = vsub.f32 0.0, %v145
        %v162 = vsub.f32 0.0, %v146
        %v163 = vsub.f32 0.0, %v147
        %v164 = vsub.f32 0.0, %v148
        %v165 = vsub.f32 0.0, %v149
        %v166 = vsub.f32 0.0, %v150
        %v167 = vmul.f32 %v151, 1.442695
        %v168 = vpow.pop %v167
        %v169 = vmul.f32 %v152, 1.442695
        %v170 = vpow.pop %v169
        %v171 = vmul.f32 %v153, 1.442695
        %v172 = vpow.pop %v171
        %v173 = vmul.f32 %v154, 1.442695
        %v174 = vpow.pop %v173
        %v175 = vmul.f32 %v155, 1.442695
        %v176 = vpow.pop %v175
        %v177 = vmul.f32 %v156, 1.442695
        %v178 = vpow.pop %v177
        %v179 = vmul.f32 %v157, 1.442695
        %v180 = vpow.pop %v179
        %v181 = vmul.f32 %v158, 1.442695
        %v182 = vpow.pop %v181
        %v183 = vmul.f32 %v159, 1.442695
        %v184 = vpow.pop %v183
        %v185 = vmul.f32 %v160, 1.442695
        %v186 = vpow.pop %v185
        %v187 = vmul.f32 %v161, 1.442695
        %v188 = vpow.pop %v187
        %v189 = vmul.f32 %v162, 1.442695
        %v190 = vpow.pop %v189
        %v191 = vmul.f32 %v163, 1.442695
        %v192 = vpow.pop %v191
        %v193 = vmul.f32 %v164, 1.442695
        %v194 = vpow.pop %v193
        %v195 = vmul.f32 %v165, 1.442695
        %v196 = vpow.pop %v195
        %v197 = vmul.f32 %v166, 1.442695
        %v198 = vpow.pop %v197
        %v199 = vadd.f32 %v168, 1.0
        %v200 = vadd.f32 %v170, 1.0
        %v201 = vadd.f32 %v172, 1.0
        %v202 = vadd.f32 %v174, 1.0
        %v203 = vadd.f32 %v176, 1.0
        %v204 = vadd.f32 %v178, 1.0
        %v205 = vadd.f32 %v180, 1.0
        %v206 = vadd.f32 %v182, 1.0
        %v207 = vadd.f32 %v184, 1.0
        %v208 = vadd.f32 %v186, 1.0
        %v209 = vadd.f32 %v188, 1.0
        %v210 = vadd.f32 %v190, 1.0
        %v211 = vadd.f32 %v192, 1.0
        %v212 = vadd.f32 %v194, 1.0
        %v213 = vadd.f32 %v196, 1.0
        %v214 = vadd.f32 %v198, 1.0
        %v215 = vrcp.pop %v199
        %v216 = vmul.f32 %v199, %v215
        %v217 = vsub.f32 1.0, %v216
        %v218 = vmul.f32 %v215, %v217
        %v219 = vadd.f32 %v215, %v218
        %vm220 = vweird.f32 %v199
        %vm221 = vweird.f32 %v215
        %vm222 = vmor %vm220, %vm221
        %v223 = vsel %vm222, %v215, %v219
        %v224 = vand.u32 2147483647, %v199
        %vm225 = vcmp.eq.f32.partialorder %v224, 8.507059e+37
        %v226 = vand.u32 %v199, 2147483648
        %v227 = vor.u32 1.1754944e-38, %v226
        %v228 = vsel %vm225, %v227, %v223
        %v229 = vmul.f32 1.0, %v228
        %v230 = vrcp.pop %v200
        %v231 = vmul.f32 %v200, %v230
        %v232 = vsub.f32 1.0, %v231
        %v233 = vmul.f32 %v230, %v232
        %v234 = vadd.f32 %v230, %v233
        %vm235 = vweird.f32 %v200
        %vm236 = vweird.f32 %v230
        %vm237 = vmor %vm235, %vm236
        %v238 = vsel %vm237, %v230, %v234
        %v239 = vand.u32 2147483647, %v200
        %vm240 = vcmp.eq.f32.partialorder %v239, 8.507059e+37
        %v241 = vand.u32 %v200, 2147483648
        %v242 = vor.u32 1.1754944e-38, %v241
        %v243 = vsel %vm240, %v242, %v238
        %v244 = vmul.f32 1.0, %v243
        %v245 = vrcp.pop %v201
        %v246 = vmul.f32 %v201, %v245
        %v247 = vsub.f32 1.0, %v246
        %v248 = vmul.f32 %v245, %v247
        %v249 = vadd.f32 %v245, %v248
        %vm250 = vweird.f32 %v201
        %vm251 = vweird.f32 %v245
        %vm252 = vmor %vm250, %vm251
        %v253 = vsel %vm252, %v245, %v249
        %v254 = vand.u32 2147483647, %v201
        %vm255 = vcmp.eq.f32.partialorder %v254, 8.507059e+37
        %v256 = vand.u32 %v201, 2147483648
        %v257 = vor.u32 1.1754944e-38, %v256
        %v258 = vsel %vm255, %v257, %v253
        %v259 = vmul.f32 1.0, %v258
        %v260 = vrcp.pop %v202
        %v261 = vmul.f32 %v202, %v260
        %v262 = vsub.f32 1.0, %v261
        %v263 = vmul.f32 %v260, %v262
        %v264 = vadd.f32 %v260, %v263
        %vm265 = vweird.f32 %v202
        %vm266 = vweird.f32 %v260
        %vm267 = vmor %vm265, %vm266
        %v268 = vsel %vm267, %v260, %v264
        %v269 = vand.u32 2147483647, %v202
        %vm270 = vcmp.eq.f32.partialorder %v269, 8.507059e+37
        %v271 = vand.u32 %v202, 2147483648
        %v272 = vor.u32 1.1754944e-38, %v271
        %v273 = vsel %vm270, %v272, %v268
        %v274 = vmul.f32 1.0, %v273
        %v275 = vrcp.pop %v203
        %v276 = vmul.f32 %v203, %v275
        %v277 = vsub.f32 1.0, %v276
        %v278 = vmul.f32 %v275, %v277
        %v279 = vadd.f32 %v275, %v278
        %vm280 = vweird.f32 %v203
        %vm281 = vweird.f32 %v275
        %vm282 = vmor %vm280, %vm281
        %v283 = vsel %vm282, %v275, %v279
        %v284 = vand.u32 2147483647, %v203
        %vm285 = vcmp.eq.f32.partialorder %v284, 8.507059e+37
        %v286 = vand.u32 %v203, 2147483648
        %v287 = vor.u32 1.1754944e-38, %v286
        %v288 = vsel %vm285, %v287, %v283
        %v289 = vmul.f32 1.0, %v288
        %v290 = vrcp.pop %v204
        %v291 = vmul.f32 %v204, %v290
        %v292 = vsub.f32 1.0, %v291
        %v293 = vmul.f32 %v290, %v292
        %v294 = vadd.f32 %v290, %v293
        %vm295 = vweird.f32 %v204
        %vm296 = vweird.f32 %v290
        %vm297 = vmor %vm295, %vm296
        %v298 = vsel %vm297, %v290, %v294
        %v299 = vand.u32 2147483647, %v204
        %vm300 = vcmp.eq.f32.partialorder %v299, 8.507059e+37
        %v301 = vand.u32 %v204, 2147483648
        %v302 = vor.u32 1.1754944e-38, %v301
        %v303 = vsel %vm300, %v302, %v298
        %v304 = vmul.f32 1.0, %v303
        %v305 = vrcp.pop %v205
        %v306 = vmul.f32 %v205, %v305
        %v307 = vsub.f32 1.0, %v306
        %v308 = vmul.f32 %v305, %v307
        %v309 = vadd.f32 %v305, %v308
        %vm310 = vweird.f32 %v205
        %vm311 = vweird.f32 %v305
        %vm312 = vmor %vm310, %vm311
        %v313 = vsel %vm312, %v305, %v309
        %v314 = vand.u32 2147483647, %v205
        %vm315 = vcmp.eq.f32.partialorder %v314, 8.507059e+37
        %v316 = vand.u32 %v205, 2147483648
        %v317 = vor.u32 1.1754944e-38, %v316
        %v318 = vsel %vm315, %v317, %v313
        %v319 = vmul.f32 1.0, %v318
        %v320 = vrcp.pop %v206
        %v321 = vmul.f32 %v206, %v320
        %v322 = vsub.f32 1.0, %v321
        %v323 = vmul.f32 %v320, %v322
        %v324 = vadd.f32 %v320, %v323
        %vm325 = vweird.f32 %v206
        %vm326 = vweird.f32 %v320
        %vm327 = vmor %vm325, %vm326
        %v328 = vsel %vm327, %v320, %v324
        %v329 = vand.u32 2147483647, %v206
        %vm330 = vcmp.eq.f32.partialorder %v329, 8.507059e+37
        %v331 = vand.u32 %v206, 2147483648
        %v332 = vor.u32 1.1754944e-38, %v331
        %v333 = vsel %vm330, %v332, %v328
        %v334 = vmul.f32 1.0, %v333
        %v335 = vrcp.pop %v207
        %v336 = vmul.f32 %v207, %v335
        %v337 = vsub.f32 1.0, %v336
        %v338 = vmul.f32 %v335, %v337
        %v339 = vadd.f32 %v335, %v338
        %vm340 = vweird.f32 %v207
        %vm341 = vweird.f32 %v335
        %vm342 = vmor %vm340, %vm341
        %v343 = vsel %vm342, %v335, %v339
        %v344 = vand.u32 2147483647, %v207
        %vm345 = vcmp.eq.f32.partialorder %v344, 8.507059e+37
        %v346 = vand.u32 %v207, 2147483648
        %v347 = vor.u32 1.1754944e-38, %v346
        %v348 = vsel %vm345, %v347, %v343
        %v349 = vmul.f32 1.0, %v348
        %v350 = vrcp.pop %v208
        %v351 = vmul.f32 %v208, %v350
        %v352 = vsub.f32 1.0, %v351
        %v353 = vmul.f32 %v350, %v352
        %v354 = vadd.f32 %v350, %v353
        %vm355 = vweird.f32 %v208
        %vm356 = vweird.f32 %v350
        %vm357 = vmor %vm355, %vm356
        %v358 = vsel %vm357, %v350, %v354
        %v359 = vand.u32 2147483647, %v208
        %vm360 = vcmp.eq.f32.partialorder %v359, 8.507059e+37
        %v361 = vand.u32 %v208, 2147483648
        %v362 = vor.u32 1.1754944e-38, %v361
        %v363 = vsel %vm360, %v362, %v358
        %v364 = vmul.f32 1.0, %v363
        %v365 = vrcp.pop %v209
        %v366 = vmul.f32 %v209, %v365
        %v367 = vsub.f32 1.0, %v366
        %v368 = vmul.f32 %v365, %v367
        %v369 = vadd.f32 %v365, %v368
        %vm370 = vweird.f32 %v209
        %vm371 = vweird.f32 %v365
        %vm372 = vmor %vm370, %vm371
        %v373 = vsel %vm372, %v365, %v369
        %v374 = vand.u32 2147483647, %v209
        %vm375 = vcmp.eq.f32.partialorder %v374, 8.507059e+37
        %v376 = vand.u32 %v209, 2147483648
        %v377 = vor.u32 1.1754944e-38, %v376
        %v378 = vsel %vm375, %v377, %v373
        %v379 = vmul.f32 1.0, %v378
        %v380 = vrcp.pop %v210
        %v381 = vmul.f32 %v210, %v380
        %v382 = vsub.f32 1.0, %v381
        %v383 = vmul.f32 %v380, %v382
        %v384 = vadd.f32 %v380, %v383
        %vm385 = vweird.f32 %v210
        %vm386 = vweird.f32 %v380
        %vm387 = vmor %vm385, %vm386
        %v388 = vsel %vm387, %v380, %v384
        %v389 = vand.u32 2147483647, %v210
        %vm390 = vcmp.eq.f32.partialorder %v389, 8.507059e+37
        %v391 = vand.u32 %v210, 2147483648
        %v392 = vor.u32 1.1754944e-38, %v391
        %v393 = vsel %vm390, %v392, %v388
        %v394 = vmul.f32 1.0, %v393
        %v395 = vrcp.pop %v211
        %v396 = vmul.f32 %v211, %v395
        %v397 = vsub.f32 1.0, %v396
        %v398 = vmul.f32 %v395, %v397
        %v399 = vadd.f32 %v395, %v398
        %vm400 = vweird.f32 %v211
        %vm401 = vweird.f32 %v395
        %vm402 = vmor %vm400, %vm401
        %v403 = vsel %vm402, %v395, %v399
        %v404 = vand.u32 2147483647, %v211
        %vm405 = vcmp.eq.f32.partialorder %v404, 8.507059e+37
        %v406 = vand.u32 %v211, 2147483648
        %v407 = vor.u32 1.1754944e-38, %v406
        %v408 = vsel %vm405, %v407, %v403
        %v409 = vmul.f32 1.0, %v408
        %v410 = vrcp.pop %v212
        %v411 = vmul.f32 %v212, %v410
        %v412 = vsub.f32 1.0, %v411
        %v413 = vmul.f32 %v410, %v412
        %v414 = vadd.f32 %v410, %v413
        %vm415 = vweird.f32 %v212
        %vm416 = vweird.f32 %v410
        %vm417 = vmor %vm415, %vm416
        %v418 = vsel %vm417, %v410, %v414
        %v419 = vand.u32 2147483647, %v212
        %vm420 = vcmp.eq.f32.partialorder %v419, 8.507059e+37
        %v421 = vand.u32 %v212, 2147483648
        %v422 = vor.u32 1.1754944e-38, %v421
        %v423 = vsel %vm420, %v422, %v418
        %v424 = vmul.f32 1.0, %v423
        %v425 = vrcp.pop %v213
        %v426 = vmul.f32 %v213, %v425
        %v427 = vsub.f32 1.0, %v426
        %v428 = vmul.f32 %v425, %v427
        %v429 = vadd.f32 %v425, %v428
        %vm430 = vweird.f32 %v213
        %vm431 = vweird.f32 %v425
        %vm432 = vmor %vm430, %vm431
        %v433 = vsel %vm432, %v425, %v429
        %v434 = vand.u32 2147483647, %v213
        %vm435 = vcmp.eq.f32.partialorder %v434, 8.507059e+37
        %v436 = vand.u32 %v213, 2147483648
        %v437 = vor.u32 1.1754944e-38, %v436
        %v438 = vsel %vm435, %v437, %v433
        %v439 = vmul.f32 1.0, %v438
        %v440 = vrcp.pop %v214
        %v441 = vmul.f32 %v214, %v440
        %v442 = vsub.f32 1.0, %v441
        %v443 = vmul.f32 %v440, %v442
        %v444 = vadd.f32 %v440, %v443
        %vm445 = vweird.f32 %v214
        %vm446 = vweird.f32 %v440
        %vm447 = vmor %vm445, %vm446
        %v448 = vsel %vm447, %v440, %v444
        %v449 = vand.u32 2147483647, %v214
        %vm450 = vcmp.eq.f32.partialorder %v449, 8.507059e+37
        %v451 = vand.u32 %v214, 2147483648
        %v452 = vor.u32 1.1754944e-38, %v451
        %v453 = vsel %vm450, %v452, %v448
        %v454 = vmul.f32 1.0, %v453
        %v455 = vmul.f32 %v135, %v229
        %v456 = vmul.f32 %v136, %v244
        %v457 = vmul.f32 %v137, %v259
        %v458 = vmul.f32 %v138, %v274
        %v459 = vmul.f32 %v139, %v289
        %v460 = vmul.f32 %v140, %v304
        %v461 = vmul.f32 %v141, %v319
        %v462 = vmul.f32 %v142, %v334
        %v463 = vmul.f32 %v143, %v349
        %v464 = vmul.f32 %v144, %v364
        %v465 = vmul.f32 %v145, %v379
        %v466 = vmul.f32 %v146, %v394
        %v467 = vmul.f32 %v147, %v409
        %v468 = vmul.f32 %v148, %v424
        %v469 = vmul.f32 %v149, %v439
        %v470 = vmul.f32 %v150, %v454
        %471 = vst [vmem:[%s134] sm:$0xff] %v455
        %472 = vst [vmem:[%s134 + $0x8] sm:$0xff] %v456
        %473 = vst [vmem:[%s134 + $0x10] sm:$0xff] %v457
        %474 = vst [vmem:[%s134 + $0x18] sm:$0xff] %v458
        %475 = vst [vmem:[%s134 + $0x20] sm:$0xff] %v459
        %476 = vst [vmem:[%s134 + $0x28] sm:$0xff] %v460
        %477 = vst [vmem:[%s134 + $0x30] sm:$0xff] %v461
        %478 = vst [vmem:[%s134 + $0x38] sm:$0xff] %v462
        %479 = vst [vmem:[%s134 + $0x40] sm:$0xff] %v463
        %480 = vst [vmem:[%s134 + $0x48] sm:$0xff] %v464
        %481 = vst [vmem:[%s134 + $0x50] sm:$0xff] %v465
        %482 = vst [vmem:[%s134 + $0x58] sm:$0xff] %v466
        %483 = vst [vmem:[%s134 + $0x60] sm:$0xff] %v467
        %484 = vst [vmem:[%s134 + $0x68] sm:$0xff] %v468
        %485 = vst [vmem:[%s134 + $0x70] sm:$0xff] %v469
        %486 = vst [vmem:[%s134 + $0x78] sm:$0xff] %v470
        %s487 = sand.u32 %s52, 1
        %s488 = scalar_lea.sflag [#allocation4], %s487
        %s489 = sand.u32 %s52, 1
        %s490 = smul.addr %s489, 128
        %s491 = scalar_lea.vmem [#allocation5], %s490
        // Predicated region
        $region29: #{tpu_custom_call.1} parent=23 // pred_check
          %p492 = pneg %p62
        $region30: #{tpu_custom_call.1} parent=23 // pred_check_branch
          %494 = sbr.rel (%p492) target = $region32
        $region31: #{tpu_custom_call.1} parent=23 // pred_region
          %496 = vsyncadd %s488, 0
          %s497 = smul.addr %s18, 16
          %s498 = smul.addr %s497, 8
          %s499 = scalar_lea.hbm %s1, %s498
          %s501 = sshll.u32 %s491, 4
          %s502 = int_to_ptr.vmem [resolvable:$true] %s501
          %s503 = sshll.u32 %s499, 4
          %s504 = int_to_ptr.hbm [resolvable:$true] %s503
          %506 = dma.vmem_to_hbm [thread:$0]  %s502, 2048, %s504, %s488
        $region32: #{tpu_custom_call.1} parent=23 // pred_fallthru
          _
      $region24: #{tpu_custom_call.1} parent=5 // pred_fallthru
        _
      %p507 = scmp.le.s32.totalorder 2, %s13
      // Predicated region
      $region33: #{tpu_custom_call.1} parent=5 // pred_check
        %p508 = pneg %p507
      $region34: #{tpu_custom_call.1} parent=5 // pred_check_branch
        %510 = sbr.rel (%p508) target = $region36
      $region35: #{tpu_custom_call.1} parent=5 // pred_region
        %s511 = ssub.s32 %s13, 2
        // Predicated region
        $region37: #{tpu_custom_call.1} parent=35 // pred_check
          %p512 = pneg %p68
        $region38: #{tpu_custom_call.1} parent=35 // pred_check_branch
          %514 = sbr.rel (%p512) target = $region40
        $region39: #{tpu_custom_call.1} parent=35 // pred_region
          %s515 = sand.u32 %s53, 1
          %s516 = scalar_lea.sflag [#allocation4], %s515
          %s517 = sand.u32 %s53, 1
          %s518 = smul.addr %s517, 128
          %s519 = scalar_lea.vmem [#allocation5], %s518
          %521 = dma.done %s516, 2048
        $region40: #{tpu_custom_call.1} parent=35 // pred_fallthru
          _
      $region36: #{tpu_custom_call.1} parent=5 // pred_fallthru
        _
    $region6: #{tpu_custom_call.1} parent=1 // loop_footer
      %s17 = sadd.s32 1, %s13
    $region7: #{tpu_custom_call.1} parent=1 // loop_footer_branch
      %12 = sbr.rel target = $region3
    $region8: #{tpu_custom_call.1} parent=1 // loop_exit
      _
    %522 = vsyncpa [#allocation3], 1
    %s523 = scalar_lea.sflag [#allocation3], 1
    %524 = vsyncpa %s523, 1
    %525 = vsyncpa [#allocation4], 1
    %s526 = scalar_lea.sflag [#allocation4], 1
    %527 = vsyncpa %s526, 1

</llo_original>
